<compile_context>
chip_gen: v6e
topology: v6e:2x2x1
jax: 0.10.0
libtpu: 0.0.40
codegen_flags: <defaults>
</compile_context>

<pallas_src>
import functools

import jax
import jax.numpy as jnp
import numpy as np
from jax import lax
from jax.experimental import pallas as pl
from jax.experimental.pallas import tpu as pltpu

_LANES = 128


def _tile_sumsq(z_ref, k_block, *, tn, m_total, mask_tail):
    """Sum of squares of the current (rows, tn) tile as a (rows, 128) f32 value.

    Chunks of 128 lanes are loaded straight from the VMEM ref (free static
    slices) and accumulated in 4 independent register chains (ILP), so no
    tile-sized scratch and no per-chunk VMEM RMW is needed.
    """
    n_chunks = tn // _LANES
    n_par = min(4, n_chunks)

    def chunk_sq(c):
        zc = z_ref[:, c * _LANES:(c + 1) * _LANES].astype(jnp.float32)
        sq = zc * zc
        if mask_tail:
            # Only the last grid step can contain out-of-array garbage; the
            # compare/select is cheap VPU filler in this HBM-bound kernel.
            col = lax.broadcasted_iota(jnp.int32, sq.shape, 1) + (
                k_block * tn + c * _LANES)
            sq = jnp.where(col < m_total, sq, 0.0)
        return sq

    sums = [chunk_sq(c) for c in range(n_par)]
    for c in range(n_par, n_chunks):
        sums[c % n_par] = sums[c % n_par] + chunk_sq(c)
    s = sums[0]
    for t in sums[1:]:
        s = s + t
    return s


def _sumsq_single_kernel(z_ref, out_ref, *, tn, m_total, mask_tail):
    """Single lane-block per core: no accumulator scratch, one pass."""
    s = _tile_sumsq(z_ref, 0, tn=tn, m_total=m_total, mask_tail=mask_tail)
    out_ref[...] = jnp.broadcast_to(jnp.sum(s), (1, _LANES)).astype(jnp.float32)


def _sumsq_multi_kernel(z_ref, out_ref, acc_ref, *, tn, m_total, mask_tail):
    """Grid = (core_split, lane_blocks); axis 1 is the reduction axis."""
    k = pl.program_id(1)
    s = _tile_sumsq(z_ref, k, tn=tn, m_total=m_total, mask_tail=mask_tail)

    @pl.when(k == 0)
    def _first():                       # write, don't zero+add, on step 0
        acc_ref[...] = s

    @pl.when(k != 0)
    def _rest():                        # single (sublane,128) RMW per step
        acc_ref[...] = acc_ref[...] + s

    @pl.when(k == pl.num_programs(1) - 1)
    def _finalize():                    # one small XLU reduce at the end
        out_ref[...] = jnp.broadcast_to(
            jnp.sum(acc_ref[...]), (1, _LANES)).astype(jnp.float32)


def waveglow_loss(z, logdet, *, sigma=1.0, elementwise_mean=True,
                  max_lane_chunks=None):
    """JAX/Pallas equivalent of WaveGlowLoss.forward((z, logdet)). z: [B, N]."""
    B, N = z.shape
    denom = float(B) * (float(N) if elementwise_mean else 1.0)
    sq_scale = 1.0 / (2.0 * float(sigma) ** 2 * denom)
    logdet_scale = 1.0 / denom

    itemsize = jnp.dtype(z.dtype).itemsize
    sublane = 16 if itemsize < 4 else 8       # packed dtypes need 16 sublanes
    n_split = 2                               # 2 TCs on v7x; harmless on 1-TC chips
    rows_total = n_split * sublane

    # --- flatten (+ rare zero-pad) so z reshapes to (rows_total, M), M % 128 == 0.
    # Padded zeros contribute nothing to the sum of squares.
    T = B * N
    unit = rows_total * _LANES
    Tp = ((T + unit - 1) // unit) * unit
    zf = z.reshape(-1)
    if Tp != T:
        # TODO(synk): for huge, oddly-sized z this pad is an extra HBM pass; a
        # masked row tail inside the kernel would avoid the copy.
        zf = jnp.pad(zf, (0, Tp - T))
    M = Tp // rows_total
    z2 = zf.reshape(rows_total, M)

    # --- lane tile: fixed large multiple of 128, cdiv grid, masked last tile.
    if max_lane_chunks is None:
        try:
            vmem_cap = int(pltpu.get_tpu_info().vmem_capacity_bytes)
        except Exception:
            vmem_cap = 64 << 20
        # 128-MiB-VMEM parts (v5e/v6e) get a 2x bigger tile/unroll than v7x.
        max_chunks = 256 if vmem_cap >= (96 << 20) else 128
    else:
        max_chunks = max(1, int(max_lane_chunks))
    tn = min(M, max_chunks * _LANES)          # multiple of 128 (M is too)
    num_k = (M + tn - 1) // tn
    mask_tail = (M % tn) != 0

    # Footprint: 2x double-buffered input tile + (sublane,128) f32 acc + output.
    tile_in_bytes = sublane * tn * itemsize
    vmem_limit = int(min(max(4 * tile_in_bytes + (4 << 20), 16 << 20), 64 << 20))

    out_shape = jax.ShapeDtypeStruct((1, n_split * _LANES), jnp.float32)

    if num_k == 1:
        kernel = functools.partial(_sumsq_single_kernel, tn=tn, m_total=M,
                                   mask_tail=mask_tail)
        partial_sums = pl.pallas_call(
            kernel,
            out_shape=out_shape,
            grid_spec=pltpu.PrefetchScalarGridSpec(
                num_scalar_prefetch=0,
                grid=(n_split,),
                in_specs=[pl.BlockSpec((sublane, tn), lambda p: (p, 0))],
                out_specs=pl.BlockSpec((1, _LANES), lambda p: (0, p)),
            ),
            compiler_params=pltpu.CompilerParams(
                dimension_semantics=("parallel",),
                vmem_limit_bytes=vmem_limit,
            ),
        )(z2)
    else:
        kernel = functools.partial(_sumsq_multi_kernel, tn=tn, m_total=M,
                                   mask_tail=mask_tail)
        partial_sums = pl.pallas_call(
            kernel,
            out_shape=out_shape,
            grid_spec=pltpu.PrefetchScalarGridSpec(
                num_scalar_prefetch=0,
                grid=(n_split, num_k),
                in_specs=[pl.BlockSpec((sublane, tn), lambda p, k: (p, k))],
                out_specs=pl.BlockSpec((1, _LANES), lambda p, k: (0, p)),
                scratch_shapes=[pltpu.VMEM((sublane, _LANES), jnp.float32)],
            ),
            compiler_params=pltpu.CompilerParams(
                dimension_semantics=("parallel", "arbitrary"),
                vmem_limit_bytes=vmem_limit,
            ),
        )(z2)

    # Combine the per-core partial sums (lane 0 of each 128-lane output block)
    # and fold in sum(logdet) (tiny XLA reduce, kept out of the kernel).
    total_sq = partial_sums[0, 0]
    for p in range(1, n_split):
        total_sq = total_sq + partial_sums[0, p * _LANES]
    logdet_sum = jnp.sum(logdet.astype(jnp.float32))
    return total_sq * sq_scale - logdet_sum * logdet_scale


def waveglow_loss_ref(z, logdet, *, sigma=1.0, elementwise_mean=True):
    sigma2_2 = float(sigma) ** 2 * 2.0
    loss = jnp.sum(z.astype(jnp.float32) ** 2, axis=1) / sigma2_2 - logdet
    loss = jnp.mean(loss)
    if elementwise_mean:
        loss = loss / z.shape[1]
    return loss


if __name__ == "__main__":
    sigma = 1.0
    elementwise_mean = True
    key = jax.random.PRNGKey(0)

    # Case 1: the canonical small shape (B=2, N=1024) -> single-block fast path.
    k1, k2, key = jax.random.split(key, 3)
    z1 = jax.random.normal(k1, (2, 1024), dtype=jnp.float32)
    l1 = jax.random.normal(k2, (2,), dtype=jnp.float32)
    out1 = jax.block_until_ready(
        waveglow_loss(z1, l1, sigma=sigma, elementwise_mean=elementwise_mean))
    ref1 = jax.block_until_ready(
        waveglow_loss_ref(z1, l1, sigma=sigma, elementwise_mean=elementwise_mean))
    np.testing.assert_allclose(np.asarray(out1), np.asarray(ref1),
                               rtol=1e-5, atol=1e-5)

    # Case 2: odd N (exercises the flat zero-pad / sublane-fill path).
    k1, k2, key = jax.random.split(key, 3)
    z2 = jax.random.normal(k1, (3, 1000), dtype=jnp.float32)
    l2 = jax.random.normal(k2, (3,), dtype=jnp.float32)
    out2 = jax.block_until_ready(waveglow_loss(z2, l2, sigma=sigma,
                                               elementwise_mean=elementwise_mean))
    ref2 = jax.block_until_ready(waveglow_loss_ref(z2, l2, sigma=sigma,
                                                   elementwise_mean=elementwise_mean))
    np.testing.assert_allclose(np.asarray(out2), np.asarray(ref2),
                               rtol=1e-5, atol=1e-5)

    # Case 3: force the multi-block path with a masked last tile (tiny tiles).
    k1, k2, key = jax.random.split(key, 3)
    z3 = jax.random.normal(k1, (2, 8704), dtype=jnp.float32)
    l3 = jax.random.normal(k2, (2,), dtype=jnp.float32)
    out3 = jax.block_until_ready(
        waveglow_loss(z3, l3, sigma=sigma, elementwise_mean=elementwise_mean,
                      max_lane_chunks=2))
    ref3 = jax.block_until_ready(waveglow_loss_ref(z3, l3, sigma=sigma,
                                                   elementwise_mean=elementwise_mean))
    np.testing.assert_allclose(np.asarray(out3), np.asarray(ref3),
                               rtol=1e-5, atol=1e-5)

    print("KERNEL_OK")
</pallas_src>

<mosaic_0001>
module attributes {stable_mosaic.version = 11 : i64} {
  func.func @_sumsq_single_kernel(%arg0: i32, %arg1: memref<8x128xf32, #tpu.memory_space<vmem>>, %arg2: memref<1x128xf32, #tpu.memory_space<vmem>>) attributes {dimension_semantics = [#tpu.dimension_semantics<parallel>], iteration_bounds = array<i64: 2>, scalar_prefetch = 0 : i64, scratch_operands = 0 : i64, tpu.core_type = #tpu.core_type<tc>, window_params = [{transform_indices = @transform_0, window_bounds = array<i64: 8, 128>}, {transform_indices = @transform_1, window_bounds = array<i64: 1, 128>}]} {
    %c0 = arith.constant 0 : index
    %c0_0 = arith.constant 0 : index
    %0 = vector.load %arg1[%c0, %c0_0] : memref<8x128xf32, #tpu.memory_space<vmem>>, vector<8x128xf32>
    %1 = arith.mulf %0, %0 : vector<8x128xf32>
    %2 = vector.shape_cast %1 : vector<8x128xf32> to vector<1x8x128xf32>
    %cst = arith.constant dense<0.000000e+00> : vector<1xf32>
    %3 = vector.multi_reduction <add>, %2, %cst [1, 2] : vector<1x8x128xf32> to vector<1xf32>
    %4 = vector.shape_cast %3 : vector<1xf32> to vector<1x1x1xf32>
    %5 = vector.extract %4[0, 0, 0] : f32 from vector<1x1x1xf32>
    %6 = vector.broadcast %5 : f32 to vector<1x128xf32>
    %c0_1 = arith.constant 0 : index
    %c0_2 = arith.constant 0 : index
    %7 = vector.load %arg2[%c0_1, %c0_2] : memref<1x128xf32, #tpu.memory_space<vmem>>, vector<1x128xf32>
    tpu.vector_store %arg2[%c0_1, %c0_2], %6 {strides = array<i32>} : memref<1x128xf32, #tpu.memory_space<vmem>>, vector<1x128xf32>,
    return
  }
  func.func @transform_0(%arg0: i32) -> (i32, i32) {
    %c0_i32 = arith.constant 0 : i32
    %c0_i32_0 = arith.constant 0 : i32
    return %arg0, %c0_i32 : i32, i32
  }
  func.func @transform_1(%arg0: i32) -> (i32, i32) {
    %c0_i32 = arith.constant 0 : i32
    %c0_i32_0 = arith.constant 0 : i32
    return %c0_i32, %arg0 : i32, i32
  }
}

</mosaic_0001>

<llo_original>
// kernel: tpu_custom_call.1
$region0: #{tpu_custom_call.1}
  #allocation0 [shape = 'u32[]', space=smem, size = 0x4, offset = 0x4, fixed_abs, tag = 'smem constant byte address 0x4 - core index']
  #allocation1 [shape = 'u32[144,128]{1,0:T(1,128)}', space=vmem, size = 0x12000, scoped, tag = 'internal scratch']
  %s0 = inlined_call_operand.hbm [shape: f32[16,128], index: 0, kind: input, shape index: {}]
  %s1 = inlined_call_operand.hbm [shape: f32[1,256], index: 1, kind: output, shape index: {}]
  %s2 = sld [smem:[#allocation0]]
  $region41: #{tpu_custom_call.1} parent=0
    _
  %s4 = ssub.s32 1, %s2
  %s5 = scalar_select 0, %s4, %s2
  $region1: #{tpu_custom_call.1} parent=0
    #allocation2 [shape = 'u8[8192]{0}', space=vmem, size = 0x2000, scoped, tag = 'input window, operand 0']
    #allocation3 [shape = 's32[2]{0}', space=sflag, size = 0x8, scoped, tag = 'scoped memory for tpu_custom_call.1']
    #allocation4 [shape = 's32[2]{0}', space=sflag, size = 0x8, scoped, tag = 'scoped memory for tpu_custom_call.1']
    #allocation5 [shape = 'u8[1024]{0}', space=vmem, size = 0x400, scoped, tag = 'output window, operand 0']
    %6 = vsyncpa [#allocation3], 0
    %s7 = scalar_lea.sflag [#allocation3], 1
    %8 = vsyncpa %s7, 0
    %9 = vsyncpa [#allocation4], 0
    %s10 = scalar_lea.sflag [#allocation4], 1
    %11 = vsyncpa %s10, 0
    loop: start=0, step=1, limit=4
    $region2: #{tpu_custom_call.1} parent=1 // loop_pre_header
      _
    $region3: #{tpu_custom_call.1} parent=1 // loop_header
      %s13 = sphi 0, %s17
      %p14 = scmp.ge.s32.totalorder %s13, 4
      %s23 = sphi 0, %s25
      %s26 = sphi 0, %s23
      %s27 = sphi 0, %s26
      %s43 = sphi 0, %s27
      %s49 = sphi 0, %s51
      %s52 = sphi 0, %s49
      %s53 = sphi 0, %s52
      %s69 = sphi 0, %s53
    $region4: #{tpu_custom_call.1} parent=1 // loop_header_branch
      %16 = sbr.rel (%p14) target = $region8
    $region5: #{tpu_custom_call.1} parent=1 // loop_body
      %s18 = ssub.s32 %s13, 1
      %s19 = ssub.s32 %s13, 2
      %s20 = sadd.s32 %s13, 1
      %s21 = ssub.s32 %s13, %s20
      %p22 = scmp.eq.s32.totalorder %s21, 0
      %s24 = sadd.s32 %s23, 1
      %s25 = scalar_select %p22, %s23, %s24
      %p28 = pneg %p22
      %p29 = scmp.eq.s32.totalorder %s13, 1
      %p30 = por %p28, %p29
      %p31 = scmp.ne.s32.totalorder %s23, %s26
      %p32 = scmp.eq.s32.totalorder %s13, 0
      %p33 = por %p31, %p32
      %p34 = scmp.ne.s32.totalorder %s23, %s26
      %p35 = scmp.eq.s32.totalorder %s18, 1
      %p36 = por %p34, %p35
      %p37 = scmp.ne.s32.totalorder %s26, %s27
      %p38 = scmp.eq.s32.totalorder %s18, 0
      %p39 = por %p37, %p38
      %p40 = scmp.ne.s32.totalorder %s26, %s27
      %p41 = scmp.eq.s32.totalorder %s19, 1
      %p42 = por %p40, %p41
      %p44 = scmp.ne.s32.totalorder %s27, %s43
      %p45 = scmp.eq.s32.totalorder %s19, 0
      %p46 = por %p44, %p45
      %s47 = ssub.s32 %s13, %s20
      %p48 = scmp.eq.s32.totalorder %s47, 0
      %s50 = sadd.s32 %s49, 1
      %s51 = scalar_select %p48, %s49, %s50
      %p54 = pneg %p48
      %p55 = scmp.eq.s32.totalorder %s13, 1
      %p56 = por %p54, %p55
      %p57 = scmp.ne.s32.totalorder %s49, %s52
      %p58 = scmp.eq.s32.totalorder %s13, 0
      %p59 = por %p57, %p58
      %p60 = scmp.ne.s32.totalorder %s49, %s52
      %p61 = scmp.eq.s32.totalorder %s18, 1
      %p62 = por %p60, %p61
      %p63 = scmp.ne.s32.totalorder %s52, %s53
      %p64 = scmp.eq.s32.totalorder %s18, 0
      %p65 = por %p63, %p64
      %p66 = scmp.ne.s32.totalorder %s52, %s53
      %p67 = scmp.eq.s32.totalorder %s19, 1
      %p68 = por %p66, %p67
      %p70 = scmp.ne.s32.totalorder %s53, %s69
      %p71 = scmp.eq.s32.totalorder %s19, 0
      %p72 = por %p70, %p71
      %p73 = scmp.le.s32.totalorder 1, %s13
      %p74 = scmp.lt.s32.totalorder %s13, 3
      %p75 = pnand %p73, %p74
      %p76 = pneg %p75
      // Predicated region
      $region9: #{tpu_custom_call.1} parent=5 // pred_check
        _
      $region10: #{tpu_custom_call.1} parent=5 // pred_check_branch
        %78 = sbr.rel (%p75) target = $region12
      $region11: #{tpu_custom_call.1} parent=5 // pred_region
        %s79 = ssub.s32 %s13, 1
      $region12: #{tpu_custom_call.1} parent=5 // pred_fallthru
        _
      %p80 = scmp.lt.s32.totalorder %s13, 2
      // Predicated region
      $region13: #{tpu_custom_call.1} parent=5 // pred_check
        %p81 = pneg %p80
      $region14: #{tpu_custom_call.1} parent=5 // pred_check_branch
        %83 = sbr.rel (%p81) target = $region16
      $region15: #{tpu_custom_call.1} parent=5 // pred_region
        // Predicated region
        $region17: #{tpu_custom_call.1} parent=15 // pred_check
          %p84 = pneg %p33
        $region18: #{tpu_custom_call.1} parent=15 // pred_check_branch
          %86 = sbr.rel (%p84) target = $region20
        $region19: #{tpu_custom_call.1} parent=15 // pred_region
          %s87 = sand.u32 %s23, 1
          %s88 = scalar_lea.sflag [#allocation3], %s87
          %s89 = sand.u32 %s23, 1
          %s90 = smul.addr %s89, 8
          %s91 = scalar_lea.vmem [#allocation2], %s90
          %s93 = ssub.s32 128, 128
          %94 = vsyncadd %s88, %s93
          %s95 = smul.addr %s13, 128
          %s96 = scalar_lea.hbm %s0, %s95
          %s98 = sshll.u32 %s91, 4
          %s99 = int_to_ptr.vmem [resolvable:$true] %s98
          %101 = dma.hbm_to_vmem [thread:$0]  %s96, 128, %s99, %s88
        $region20: #{tpu_custom_call.1} parent=15 // pred_fallthru
          _
      $region16: #{tpu_custom_call.1} parent=5 // pred_fallthru
        _
      %p102 = scmp.le.s32.totalorder 1, %s13
      %p103 = scmp.lt.s32.totalorder %s13, 3
      %p104 = pnand %p102, %p103
      %p105 = pneg %p104
      // Predicated region
      $region21: #{tpu_custom_call.1} parent=5 // pred_check
        _
      $region22: #{tpu_custom_call.1} parent=5 // pred_check_branch
        %107 = sbr.rel (%p104) target = $region24
      $region23: #{tpu_custom_call.1} parent=5 // pred_region
        %s108 = ssub.s32 %s13, 1
        %s109 = sand.u32 %s26, 1
        %s110 = scalar_lea.sflag [#allocation3], %s109
        %s111 = sand.u32 %s26, 1
        %s112 = smul.addr %s111, 8
        %s113 = scalar_lea.vmem [#allocation2], %s112
        // Predicated region
        $region25: #{tpu_custom_call.1} parent=23 // pred_check
          %p114 = pneg %p39
        $region26: #{tpu_custom_call.1} parent=23 // pred_check_branch
          %116 = sbr.rel (%p114) target = $region28
        $region27: #{tpu_custom_call.1} parent=23 // pred_region
          %117 = dma.done %s110, 128
        $region28: #{tpu_custom_call.1} parent=23 // pred_fallthru
          _
        %s118 = sand.u32 %s26, 1
        %s119 = scalar_lea.sflag [#allocation3], %s118
        %s120 = sand.u32 %s26, 1
        %s121 = smul.addr %s120, 8
        %s122 = scalar_lea.vmem [#allocation2], %s121
        %p123 = pneg %p39
        %p124 = pneg %p36
        %p125 = pneg %p65
        %p126 = pneg %p62
        %s127 = sand.u32 %s52, 1
        %s128 = scalar_lea.sflag [#allocation4], %s127
        %s129 = sand.u32 %s52, 1
        %s130 = scalar_lea.vmem [#allocation5], %s129
        %v131 = vld [vmem:[%s113] sm:$0xff]
        %v132 = vmul.f32 %v131, %v131
        %133 = vadd.xlane.f32.xlu0 %v132
        %v134 = vpop.xlane.xlu0 %133
        %v135 = vrot.slane %v134, 4
        %v136 = vadd.f32 %v134, %v135
        %v137 = vrot.slane %v136, 2
        %v138 = vadd.f32 %v136, %v137
        %v139 = vrot.slane %v138, 1
        %v140 = vadd.f32 %v138, %v139
        %s141 = vtos %v140
        %v142 = vstv %s141
        %143 = vst [vmem:[%s130] sm:$0x1] %v142
        %s144 = sand.u32 %s52, 1
        %s145 = scalar_lea.sflag [#allocation4], %s144
        %s146 = sand.u32 %s52, 1
        %s147 = scalar_lea.vmem [#allocation5], %s146
        // Predicated region
        $region29: #{tpu_custom_call.1} parent=23 // pred_check
          %p148 = pneg %p62
        $region30: #{tpu_custom_call.1} parent=23 // pred_check_branch
          %150 = sbr.rel (%p148) target = $region32
        $region31: #{tpu_custom_call.1} parent=23 // pred_region
          %s152 = ssub.s32 16, 16
          %153 = vsyncadd %s145, %s152
          %s154 = smul.addr %s18, 16
          %s155 = scalar_lea.hbm %s1, %s154
          %s157 = sshll.u32 %s147, 4
          %s158 = int_to_ptr.vmem [resolvable:$true] %s157
          %160 = dma.vmem_to_hbm [thread:$0]  %s158, 16, %s155, %s145
        $region32: #{tpu_custom_call.1} parent=23 // pred_fallthru
          _
      $region24: #{tpu_custom_call.1} parent=5 // pred_fallthru
        _
      %p161 = scmp.le.s32.totalorder 2, %s13
      // Predicated region
      $region33: #{tpu_custom_call.1} parent=5 // pred_check
        %p162 = pneg %p161
      $region34: #{tpu_custom_call.1} parent=5 // pred_check_branch
        %164 = sbr.rel (%p162) target = $region36
      $region35: #{tpu_custom_call.1} parent=5 // pred_region
        %s165 = ssub.s32 %s13, 2
        // Predicated region
        $region37: #{tpu_custom_call.1} parent=35 // pred_check
          %p166 = pneg %p68
        $region38: #{tpu_custom_call.1} parent=35 // pred_check_branch
          %168 = sbr.rel (%p166) target = $region40
        $region39: #{tpu_custom_call.1} parent=35 // pred_region
          %s169 = sand.u32 %s53, 1
          %s170 = scalar_lea.sflag [#allocation4], %s169
          %s171 = sand.u32 %s53, 1
          %s172 = scalar_lea.vmem [#allocation5], %s171
          %173 = dma.done %s170, 16
        $region40: #{tpu_custom_call.1} parent=35 // pred_fallthru
          _
      $region36: #{tpu_custom_call.1} parent=5 // pred_fallthru
        _
    $region6: #{tpu_custom_call.1} parent=1 // loop_footer
      %s17 = sadd.s32 1, %s13
    $region7: #{tpu_custom_call.1} parent=1 // loop_footer_branch
      %12 = sbr.rel target = $region3
    $region8: #{tpu_custom_call.1} parent=1 // loop_exit
      _
    %174 = vsyncpa [#allocation3], 1
    %s175 = scalar_lea.sflag [#allocation3], 1
    %176 = vsyncpa %s175, 1
    %177 = vsyncpa [#allocation4], 1
    %s178 = scalar_lea.sflag [#allocation4], 1
    %179 = vsyncpa %s178, 1

</llo_original>
